<compile_context>
chip_gen: v6e
topology: v6e:2x2x1
jax: 0.10.0
libtpu: 0.0.40
codegen_flags: <defaults>
</compile_context>

<pallas_src>
import functools

import jax
import jax.numpy as jnp
from jax import lax
from jax.experimental import pallas as pl
from jax.experimental.pallas import tpu as pltpu

LANES = 128
SUBLANES = 8


def _attn_bn_kernel(ah_ref, enc_ref, wslab_ref, vslab_ref, out_ref,
                    *, B, D, W, H, O, pad_rows):
    ah = ah_ref[...]          # (B, D)
    enc = enc_ref[...]        # (B, W, D)

    # --- static slices of the two packed parameter slabs -------------------
    w_attn = wslab_ref[:, 0:W]                        # (D, W)
    w_comb = wslab_ref[:, W:W + H]                    # (D, H)
    w_dec = wslab_ref[0:H, W + H:W + H + O]           # (H, O)

    b_attn = vslab_ref[0:1, 0:W]                      # (1, W)
    b_comb = vslab_ref[1:2, 0:H]                      # (1, H)
    gamma = vslab_ref[2:3, 0:H]                       # (1, H)
    beta = vslab_ref[3:4, 0:H]                        # (1, H)
    b_dec = vslab_ref[4:5, 0:O]                       # (1, O)

    # --- attn = Linear(D, W); softmax over the W axis -----------------------
    logits = jnp.dot(ah, w_attn, preferred_element_type=jnp.float32) + b_attn
    m1 = jnp.max(logits, axis=1, keepdims=True)
    e1 = jnp.exp(logits - m1)
    aw = e1 * pl.reciprocal(jnp.sum(e1, axis=1, keepdims=True), approx=True)

    # --- torch.bmm(aw.unsqueeze(1), enc_outs) on the MXU -> (B, D) ----------
    applied = jnp.einsum("bqw,bwd->bqd", aw[:, None, :], enc,
                         preferred_element_type=jnp.float32)[:, 0, :]

    # --- attn_combine = Linear(D, H); ReLU -----------------------------------
    comb = jnp.dot(applied, w_comb, preferred_element_type=jnp.float32) + b_comb
    comb = jnp.maximum(comb, 0.0)

    # --- BatchNorm1d(H), training mode: biased batch stats, eps=1e-5 --------
    mean = jnp.mean(comb, axis=0, keepdims=True)
    var = jnp.mean((comb - mean) ** 2, axis=0, keepdims=True)
    bn = (comb - mean) * lax.rsqrt(var + 1e-5) * gamma + beta

    # --- dec_linear = Linear(H, O); ReLU; softmax over last dim -------------
    dec = jnp.dot(bn, w_dec, preferred_element_type=jnp.float32) + b_dec
    dec = jnp.maximum(dec, 0.0)
    m2 = jnp.max(dec, axis=1, keepdims=True)
    e2 = jnp.exp(dec - m2)
    probs = e2 * pl.reciprocal(jnp.sum(e2, axis=1, keepdims=True), approx=True)

    # --- one lane-dense (pad_rows, 128) slab, single unmasked store ---------
    packed = jnp.concatenate(
        [aw, probs, jnp.zeros((B, LANES - (W + O)), jnp.float32)], axis=1)
    if pad_rows > B:
        packed = jnp.concatenate(
            [packed, jnp.zeros((pad_rows - B, LANES), jnp.float32)], axis=0)
    out_ref[...] = packed.astype(out_ref.dtype)


def attention_bn_classifier(attn_hidden, enc_outs, params):
    B, D = attn_hidden.shape
    W = enc_outs.shape[1]
    H = params["w_comb"].shape[1]
    O = params["w_dec"].shape[1]
    assert W + H + O <= LANES and W + O <= LANES and H <= D
    pad_rows = max(SUBLANES, ((B + SUBLANES - 1) // SUBLANES) * SUBLANES)

    # Pack the 10 small parameter tensors into two lane-dense VMEM slabs.
    wslab = jnp.zeros((D, LANES), jnp.float32)
    wslab = wslab.at[:, 0:W].set(params["w_attn"])
    wslab = wslab.at[:, W:W + H].set(params["w_comb"])
    wslab = wslab.at[0:H, W + H:W + H + O].set(params["w_dec"])

    vslab = jnp.zeros((SUBLANES, LANES), jnp.float32)
    vslab = vslab.at[0, 0:W].set(params["b_attn"].reshape(-1))
    vslab = vslab.at[1, 0:H].set(params["b_comb"].reshape(-1))
    vslab = vslab.at[2, 0:H].set(params["bn_gamma"].reshape(-1))
    vslab = vslab.at[3, 0:H].set(params["bn_beta"].reshape(-1))
    vslab = vslab.at[4, 0:O].set(params["b_dec"].reshape(-1))

    vmem = pl.BlockSpec(memory_space=pltpu.MemorySpace.VMEM)
    kernel = functools.partial(_attn_bn_kernel, B=B, D=D, W=W, H=H, O=O,
                               pad_rows=pad_rows)

    slab = pl.pallas_call(
        kernel,
        out_shape=jax.ShapeDtypeStruct((pad_rows, LANES), jnp.float32),
        in_specs=[vmem, vmem, vmem, vmem],
        out_specs=vmem,
    )(attn_hidden, enc_outs, wslab, vslab)

    aw = slab[:B, 0:W]
    probs = slab[:B, W:W + O]
    # dec_softmax was applied on output.unsqueeze(1), dim=2 -> return (B, 1, O)
    return probs.reshape(B, 1, O), aw


def _reference(attn_hidden, enc_outs, p):
    """Pure-JAX reference mirroring the torch forward (training-mode BN)."""
    logits = attn_hidden @ p["w_attn"] + p["b_attn"]
    aw = jax.nn.softmax(logits, axis=1)
    applied = jnp.einsum("bw,bwd->bd", aw, enc_outs)
    comb = jax.nn.relu(applied @ p["w_comb"] + p["b_comb"])
    mean = jnp.mean(comb, axis=0, keepdims=True)
    var = jnp.mean((comb - mean) ** 2, axis=0, keepdims=True)
    bn = (comb - mean) / jnp.sqrt(var + 1e-5) * p["bn_gamma"] + p["bn_beta"]
    dec = jax.nn.relu(bn @ p["w_dec"] + p["b_dec"])
    out = jax.nn.softmax(dec, axis=-1)
    return out[:, None, :], aw


if __name__ == "__main__":
    # Module hyperparameters (small, BIDIR=True so D = 2*HIDDEN_SIZE)
    HIDDEN_SIZE = 32
    WINDOW_SIZE = 8
    OUTPUT_SIZE = 8
    BIDIR = True
    B = 4
    D = 2 * HIDDEN_SIZE if BIDIR else HIDDEN_SIZE

    key = jax.random.PRNGKey(0)
    ks = jax.random.split(key, 8)

    # Deterministic parameter init (synthetic; shapes match nn.Linear/BatchNorm1d,
    # with Linear weights stored pre-transposed as (in, out)).
    params = {
        "w_attn": jax.random.normal(ks[0], (D, WINDOW_SIZE), jnp.float32) * 0.1,
        "b_attn": jax.random.normal(ks[1], (1, WINDOW_SIZE), jnp.float32) * 0.1,
        "w_comb": jax.random.normal(ks[2], (D, HIDDEN_SIZE), jnp.float32) * 0.1,
        "b_comb": jax.random.normal(ks[3], (1, HIDDEN_SIZE), jnp.float32) * 0.1,
        "bn_gamma": jnp.ones((1, HIDDEN_SIZE), jnp.float32),
        "bn_beta": jnp.zeros((1, HIDDEN_SIZE), jnp.float32),
        "w_dec": jax.random.normal(ks[4], (HIDDEN_SIZE, OUTPUT_SIZE), jnp.float32) * 0.1,
        "b_dec": jax.random.normal(ks[5], (1, OUTPUT_SIZE), jnp.float32) * 0.1,
    }

    attn_hidden = jax.random.normal(ks[6], (B, D), jnp.float32)
    enc_outs = jax.random.normal(ks[7], (B, WINDOW_SIZE, D), jnp.float32)

    out, aw = attention_bn_classifier(attn_hidden, enc_outs, params)
    out = jax.block_until_ready(out)
    aw = jax.block_until_ready(aw)

    ref_out, ref_aw = _reference(attn_hidden, enc_outs, params)
    assert out.shape == (B, 1, OUTPUT_SIZE) and aw.shape == (B, WINDOW_SIZE)
    # Tolerance relaxed (vs 1e-5) because both softmax denominators use the
    # approximate EUP reciprocal (pl.reciprocal(..., approx=True)).
    assert jnp.allclose(out, ref_out, atol=2e-3, rtol=2e-3), \
        float(jnp.max(jnp.abs(out - ref_out)))
    assert jnp.allclose(aw, ref_aw, atol=2e-3, rtol=2e-3), \
        float(jnp.max(jnp.abs(aw - ref_aw)))

    print("KERNEL_OK")
</pallas_src>

<mosaic_0001>
module attributes {stable_mosaic.version = 11 : i64} {
  func.func @_attn_bn_kernel(%arg0: memref<4x64xf32, #tpu.memory_space<vmem>>, %arg1: memref<4x8x64xf32, #tpu.memory_space<vmem>>, %arg2: memref<64x128xf32, #tpu.memory_space<vmem>>, %arg3: memref<8x128xf32, #tpu.memory_space<vmem>>, %arg4: memref<8x128xf32, #tpu.memory_space<vmem>>) attributes {dimension_semantics = [], scalar_prefetch = 0 : i64, scratch_operands = 0 : i64, tpu.core_type = #tpu.core_type<tc>} {
    %c0 = arith.constant 0 : index
    %c0_0 = arith.constant 0 : index
    %0 = vector.load %arg0[%c0, %c0_0] : memref<4x64xf32, #tpu.memory_space<vmem>>, vector<4x64xf32>
    %c0_1 = arith.constant 0 : index
    %c0_2 = arith.constant 0 : index
    %c0_3 = arith.constant 0 : index
    %1 = vector.load %arg1[%c0_1, %c0_2, %c0_3] : memref<4x8x64xf32, #tpu.memory_space<vmem>>, vector<4x8x64xf32>
    %c0_4 = arith.constant 0 : index
    %c0_5 = arith.constant 0 : index
    %2 = vector.load %arg2[%c0_4, %c0_5] : memref<64x128xf32, #tpu.memory_space<vmem>>, vector<64x8xf32>
    %c0_6 = arith.constant 0 : index
    %c8 = arith.constant 8 : index
    %3 = vector.load %arg2[%c0_6, %c8] : memref<64x128xf32, #tpu.memory_space<vmem>>, vector<64x32xf32>
    %c0_7 = arith.constant 0 : index
    %c40 = arith.constant 40 : index
    %4 = vector.load %arg2[%c0_7, %c40] : memref<64x128xf32, #tpu.memory_space<vmem>>, vector<32x8xf32>
    %c0_8 = arith.constant 0 : index
    %c0_9 = arith.constant 0 : index
    %5 = vector.load %arg3[%c0_8, %c0_9] : memref<8x128xf32, #tpu.memory_space<vmem>>, vector<1x8xf32>
    %c1 = arith.constant 1 : index
    %c0_10 = arith.constant 0 : index
    %6 = vector.load %arg3[%c1, %c0_10] : memref<8x128xf32, #tpu.memory_space<vmem>>, vector<1x32xf32>
    %c2 = arith.constant 2 : index
    %c0_11 = arith.constant 0 : index
    %7 = vector.load %arg3[%c2, %c0_11] : memref<8x128xf32, #tpu.memory_space<vmem>>, vector<1x32xf32>
    %c3 = arith.constant 3 : index
    %c0_12 = arith.constant 0 : index
    %8 = vector.load %arg3[%c3, %c0_12] : memref<8x128xf32, #tpu.memory_space<vmem>>, vector<1x32xf32>
    %c4 = arith.constant 4 : index
    %c0_13 = arith.constant 0 : index
    %9 = vector.load %arg3[%c4, %c0_13] : memref<8x128xf32, #tpu.memory_space<vmem>>, vector<1x8xf32>
    %cst = arith.constant dense<0.000000e+00> : vector<4x8xf32>
    %10 = tpu.matmul %0, %2, %cst {dimension_numbers = #tpu.dot_dimension_numbers<[1], [0], [0], [1], [0, 0, 1, 1], [], []>} : vector<4x64xf32>, vector<64x8xf32>, vector<4x8xf32> -> vector<4x8xf32>
    %11 = vector.broadcast %5 : vector<1x8xf32> to vector<4x8xf32>
    %12 = arith.addf %10, %11 : vector<4x8xf32>
    %cst_14 = arith.constant dense<0xFF800000> : vector<4xf32>
    %13 = vector.multi_reduction <maximumf>, %12, %cst_14 [1] : vector<4x8xf32> to vector<4xf32>
    %14 = vector.shape_cast %13 : vector<4xf32> to vector<4x1xf32>
    %15 = vector.broadcast %14 : vector<4x1xf32> to vector<4x8xf32>
    %16 = arith.subf %12, %15 : vector<4x8xf32>
    %17 = math.exp %16 : vector<4x8xf32>
    %cst_15 = arith.constant dense<0.000000e+00> : vector<4xf32>
    %18 = vector.multi_reduction <add>, %17, %cst_15 [1] : vector<4x8xf32> to vector<4xf32>
    %19 = vector.shape_cast %18 : vector<4xf32> to vector<4x1xf32>
    %20 = tpu.reciprocal %19 {approx = true} : vector<4x1xf32> -> vector<4x1xf32>
    %21 = vector.broadcast %20 : vector<4x1xf32> to vector<4x8xf32>
    %22 = arith.mulf %17, %21 : vector<4x8xf32>
    %23 = vector.shape_cast %22 : vector<4x8xf32> to vector<4x1x8xf32>
    "tpu.trace_start"() <{level = 10 : i32, message = "bqw,bwd->bqd"}> : () -> ()
    %cst_16 = arith.constant dense<0.000000e+00> : vector<4x1x64xf32>
    %24 = tpu.matmul %23, %1, %cst_16 {dimension_numbers = #tpu.dot_dimension_numbers<[2], [1], [1], [2], [0, 0, 0, 1, 1, 2], [0], [0]>} : vector<4x1x8xf32>, vector<4x8x64xf32>, vector<4x1x64xf32> -> vector<4x1x64xf32>
    "tpu.trace_stop"() : () -> ()
    %25 = vector.shape_cast %24 : vector<4x1x64xf32> to vector<4x64xf32>
    %cst_17 = arith.constant dense<0.000000e+00> : vector<4x32xf32>
    %26 = tpu.matmul %25, %3, %cst_17 {dimension_numbers = #tpu.dot_dimension_numbers<[1], [0], [0], [1], [0, 0, 1, 1], [], []>} : vector<4x64xf32>, vector<64x32xf32>, vector<4x32xf32> -> vector<4x32xf32>
    %27 = vector.broadcast %6 : vector<1x32xf32> to vector<4x32xf32>
    %28 = arith.addf %26, %27 : vector<4x32xf32>
    %cst_18 = arith.constant 0.000000e+00 : f32
    %29 = vector.broadcast %cst_18 : f32 to vector<4x32xf32>
    %30 = arith.maximumf %28, %29 : vector<4x32xf32>
    %cst_19 = arith.constant dense<0.000000e+00> : vector<32xf32>
    %31 = vector.multi_reduction <add>, %30, %cst_19 [0] : vector<4x32xf32> to vector<32xf32>
    %32 = vector.shape_cast %31 : vector<32xf32> to vector<1x32xf32>
    %cst_20 = arith.constant 4.000000e+00 : f32
    %33 = vector.broadcast %cst_20 : f32 to vector<1x32xf32>
    %34 = arith.divf %32, %33 : vector<1x32xf32>
    %35 = vector.broadcast %34 : vector<1x32xf32> to vector<4x32xf32>
    %36 = arith.subf %30, %35 : vector<4x32xf32>
    %37 = arith.mulf %36, %36 : vector<4x32xf32>
    %cst_21 = arith.constant dense<0.000000e+00> : vector<32xf32>
    %38 = vector.multi_reduction <add>, %37, %cst_21 [0] : vector<4x32xf32> to vector<32xf32>
    %39 = vector.shape_cast %38 : vector<32xf32> to vector<1x32xf32>
    %cst_22 = arith.constant 4.000000e+00 : f32
    %40 = vector.broadcast %cst_22 : f32 to vector<1x32xf32>
    %41 = arith.divf %39, %40 : vector<1x32xf32>
    %42 = vector.broadcast %34 : vector<1x32xf32> to vector<4x32xf32>
    %43 = arith.subf %30, %42 : vector<4x32xf32>
    %cst_23 = arith.constant 9.99999974E-6 : f32
    %44 = vector.broadcast %cst_23 : f32 to vector<1x32xf32>
    %45 = arith.addf %41, %44 : vector<1x32xf32>
    %46 = math.rsqrt %45 : vector<1x32xf32>
    %47 = vector.broadcast %46 : vector<1x32xf32> to vector<4x32xf32>
    %48 = arith.mulf %43, %47 : vector<4x32xf32>
    %49 = vector.broadcast %7 : vector<1x32xf32> to vector<4x32xf32>
    %50 = arith.mulf %48, %49 : vector<4x32xf32>
    %51 = vector.broadcast %8 : vector<1x32xf32> to vector<4x32xf32>
    %52 = arith.addf %50, %51 : vector<4x32xf32>
    %cst_24 = arith.constant dense<0.000000e+00> : vector<4x8xf32>
    %53 = tpu.matmul %52, %4, %cst_24 {dimension_numbers = #tpu.dot_dimension_numbers<[1], [0], [0], [1], [0, 0, 1, 1], [], []>} : vector<4x32xf32>, vector<32x8xf32>, vector<4x8xf32> -> vector<4x8xf32>
    %54 = vector.broadcast %9 : vector<1x8xf32> to vector<4x8xf32>
    %55 = arith.addf %53, %54 : vector<4x8xf32>
    %cst_25 = arith.constant 0.000000e+00 : f32
    %56 = vector.broadcast %cst_25 : f32 to vector<4x8xf32>
    %57 = arith.maximumf %55, %56 : vector<4x8xf32>
    %cst_26 = arith.constant dense<0xFF800000> : vector<4xf32>
    %58 = vector.multi_reduction <maximumf>, %57, %cst_26 [1] : vector<4x8xf32> to vector<4xf32>
    %59 = vector.shape_cast %58 : vector<4xf32> to vector<4x1xf32>
    %60 = vector.broadcast %59 : vector<4x1xf32> to vector<4x8xf32>
    %61 = arith.subf %57, %60 : vector<4x8xf32>
    %62 = math.exp %61 : vector<4x8xf32>
    %cst_27 = arith.constant dense<0.000000e+00> : vector<4xf32>
    %63 = vector.multi_reduction <add>, %62, %cst_27 [1] : vector<4x8xf32> to vector<4xf32>
    %64 = vector.shape_cast %63 : vector<4xf32> to vector<4x1xf32>
    %65 = tpu.reciprocal %64 {approx = true} : vector<4x1xf32> -> vector<4x1xf32>
    %66 = vector.broadcast %65 : vector<4x1xf32> to vector<4x8xf32>
    %67 = arith.mulf %62, %66 : vector<4x8xf32>
    %cst_28 = arith.constant 0.000000e+00 : f32
    %68 = vector.broadcast %cst_28 : f32 to vector<4x112xf32>
    %69 = tpu.concatenate %22, %67, %68 in 1 : vector<4x8xf32>, vector<4x8xf32>, vector<4x112xf32> -> vector<4x128xf32>
    %cst_29 = arith.constant 0.000000e+00 : f32
    %70 = vector.broadcast %cst_29 : f32 to vector<4x128xf32>
    %71 = tpu.concatenate %69, %70 in 0 : vector<4x128xf32>, vector<4x128xf32> -> vector<8x128xf32>
    %c0_30 = arith.constant 0 : index
    %c0_31 = arith.constant 0 : index
    %72 = vector.load %arg4[%c0_30, %c0_31] : memref<8x128xf32, #tpu.memory_space<vmem>>, vector<8x128xf32>
    tpu.vector_store %arg4[%c0_30, %c0_31], %71 {strides = array<i32>} : memref<8x128xf32, #tpu.memory_space<vmem>>, vector<8x128xf32>,
    return
  }
}

</mosaic_0001>

<llo_original>
// kernel: tpu_custom_call.1
$region0: #{tpu_custom_call.1}
  #allocation0 [shape = 'u32[]', space=smem, size = 0x4, offset = 0x4, fixed_abs, tag = 'smem constant byte address 0x4 - core index']
  #allocation1 [shape = 'u32[144,128]{1,0:T(1,128)}', space=vmem, size = 0x12000, scoped, tag = 'internal scratch']
  %s0 = inlined_call_operand.hbm [shape: f32[4,64], index: 0, kind: input, shape index: {}]
  %s1 = inlined_call_operand.hbm [shape: f32[4,8,64], index: 1, kind: input, shape index: {}]
  %s2 = inlined_call_operand.hbm [shape: f32[64,128], index: 2, kind: input, shape index: {}]
  %s3 = inlined_call_operand.hbm [shape: f32[8,128], index: 3, kind: input, shape index: {}]
  %s4 = inlined_call_operand.hbm [shape: f32[8,128], index: 4, kind: output, shape index: {}]
  %s5 = sld [smem:[#allocation0]]
  $region42: #{tpu_custom_call.1} parent=0
    _
  %s7 = ssub.s32 1, %s5
  %s8 = scalar_select 0, %s7, %s5
  $region1: #{tpu_custom_call.1} parent=0
    #allocation2 [shape = 'u8[2048]{0}', space=vmem, size = 0x800, scoped, tag = 'input window, operand 0, single buffered']
    #allocation3 [shape = 's32[1]{0}', space=sflag, size = 0x4, scoped, tag = 'scoped memory for tpu_custom_call.1']
    #allocation4 [shape = 's32[1]{0}', space=sflag, size = 0x4, scoped, tag = 'scoped memory for tpu_custom_call.1']
    #allocation5 [shape = 'u8[16384]{0}', space=vmem, size = 0x4000, scoped, tag = 'input window, operand 1, single buffered']
    #allocation6 [shape = 's32[1]{0}', space=sflag, size = 0x4, scoped, tag = 'scoped memory for tpu_custom_call.1']
    #allocation7 [shape = 'u8[32768]{0}', space=vmem, size = 0x8000, scoped, tag = 'input window, operand 2, single buffered']
    #allocation8 [shape = 'u8[4096]{0}', space=vmem, size = 0x1000, scoped, tag = 'input window, operand 3, single buffered']
    #allocation9 [shape = 's32[1]{0}', space=sflag, size = 0x4, scoped, tag = 'scoped memory for tpu_custom_call.1']
    #allocation10 [shape = 'u8[4096]{0}', space=vmem, size = 0x1000, scoped, tag = 'output window, operand 0, single buffered']
    %9 = vsyncpa [#allocation3], 0
    %10 = vsyncpa [#allocation6], 0
    %11 = vsyncpa [#allocation9], 0
    %12 = vsyncpa [#allocation4], 0
    // Predicated region
    $region2: #{tpu_custom_call.1} parent=1 // pred_check
      _
    $region3: #{tpu_custom_call.1} parent=1 // pred_check_branch
      %14 = sbr.rel (0) target = $region5
    $region4: #{tpu_custom_call.1} parent=1 // pred_region
      %s16 = ssub.s32 64, 64
      %17 = vsyncadd [#allocation3], %s16
      %s19 = sshll.u32 [#allocation2], 4
      %s20 = int_to_ptr.vmem [resolvable:$true] %s19
      %22 = dma.hbm_to_vmem [thread:$0]  %s0, 64, %s20, [#allocation3]
    $region5: #{tpu_custom_call.1} parent=1 // pred_fallthru
      _
    // Predicated region
    $region6: #{tpu_custom_call.1} parent=1 // pred_check
      _
    $region7: #{tpu_custom_call.1} parent=1 // pred_check_branch
      %24 = sbr.rel (0) target = $region9
    $region8: #{tpu_custom_call.1} parent=1 // pred_region
      %s26 = ssub.s32 512, 512
      %27 = vsyncadd [#allocation6], %s26
      %s28 = sshll.u32 [#allocation5], 4
      %s29 = int_to_ptr.vmem [resolvable:$true] %s28
      %34 = dma.hbm_to_vmem [thread:$0]  %s1, 512, %s29, [#allocation6], 128, 128, 8
    $region9: #{tpu_custom_call.1} parent=1 // pred_fallthru
      _
    // Predicated region
    $region10: #{tpu_custom_call.1} parent=1 // pred_check
      _
    $region11: #{tpu_custom_call.1} parent=1 // pred_check_branch
      %36 = sbr.rel (0) target = $region13
    $region12: #{tpu_custom_call.1} parent=1 // pred_region
      %s38 = ssub.s32 1024, 1024
      %39 = vsyncadd [#allocation6], %s38
      %s40 = sshll.u32 [#allocation7], 4
      %s41 = int_to_ptr.vmem [resolvable:$true] %s40
      %46 = dma.hbm_to_vmem [thread:$0]  %s2, 1024, %s41, [#allocation6], 128, 128, 8
    $region13: #{tpu_custom_call.1} parent=1 // pred_fallthru
      _
    // Predicated region
    $region14: #{tpu_custom_call.1} parent=1 // pred_check
      _
    $region15: #{tpu_custom_call.1} parent=1 // pred_check_branch
      %48 = sbr.rel (0) target = $region17
    $region16: #{tpu_custom_call.1} parent=1 // pred_region
      %s50 = ssub.s32 128, 128
      %51 = vsyncadd [#allocation9], %s50
      %s53 = sshll.u32 [#allocation8], 4
      %s54 = int_to_ptr.vmem [resolvable:$true] %s53
      %56 = dma.hbm_to_vmem [thread:$0]  %s3, 128, %s54, [#allocation9]
    $region17: #{tpu_custom_call.1} parent=1 // pred_fallthru
      _
    // Predicated region
    $region18: #{tpu_custom_call.1} parent=1 // pred_check
      _
    $region19: #{tpu_custom_call.1} parent=1 // pred_check_branch
      %58 = sbr.rel (0) target = $region21
    $region20: #{tpu_custom_call.1} parent=1 // pred_region
      %59 = dma.done [#allocation3], 64
    $region21: #{tpu_custom_call.1} parent=1 // pred_fallthru
      _
    // Predicated region
    $region22: #{tpu_custom_call.1} parent=1 // pred_check
      _
    $region23: #{tpu_custom_call.1} parent=1 // pred_check_branch
      %61 = sbr.rel (0) target = $region25
    $region24: #{tpu_custom_call.1} parent=1 // pred_region
      %62 = dma.done [#allocation6], 512
    $region25: #{tpu_custom_call.1} parent=1 // pred_fallthru
      _
    // Predicated region
    $region26: #{tpu_custom_call.1} parent=1 // pred_check
      _
    $region27: #{tpu_custom_call.1} parent=1 // pred_check_branch
      %64 = sbr.rel (0) target = $region29
    $region28: #{tpu_custom_call.1} parent=1 // pred_region
      %65 = dma.done [#allocation6], 1024
    $region29: #{tpu_custom_call.1} parent=1 // pred_fallthru
      _
    // Predicated region
    $region30: #{tpu_custom_call.1} parent=1 // pred_check
      _
    $region31: #{tpu_custom_call.1} parent=1 // pred_check_branch
      %67 = sbr.rel (0) target = $region33
    $region32: #{tpu_custom_call.1} parent=1 // pred_region
      %68 = dma.done [#allocation9], 128
    $region33: #{tpu_custom_call.1} parent=1 // pred_fallthru
      _
    %v69 = vld [vmem:[#allocation2] sm:$0xf]
    %v70 = vld [vmem:[#allocation5] sm:$0xff]
    %v71 = vld [vmem:[#allocation5 + $0x8] sm:$0xff]
    %v72 = vld [vmem:[#allocation5 + $0x10] sm:$0xff]
    %v73 = vld [vmem:[#allocation5 + $0x18] sm:$0xff]
    %v74 = vld [vmem:[#allocation7] sm:$0xff]
    %v75 = vld [vmem:[#allocation7 + $0x8] sm:$0xff]
    %v76 = vld [vmem:[#allocation7 + $0x10] sm:$0xff]
    %v77 = vld [vmem:[#allocation7 + $0x18] sm:$0xff]
    %v78 = vld [vmem:[#allocation7 + $0x20] sm:$0xff]
    %v79 = vld [vmem:[#allocation7 + $0x28] sm:$0xff]
    %v80 = vld [vmem:[#allocation7 + $0x30] sm:$0xff]
    %v81 = vld [vmem:[#allocation7 + $0x38] sm:$0xff]
    %v82 = vld [vmem:[#allocation7] sm:$0xff]
    %v83 = vld [vmem:[#allocation7 + $0x8] sm:$0xff]
    %v84 = vld [vmem:[#allocation7 + $0x10] sm:$0xff]
    %v85 = vld [vmem:[#allocation7 + $0x18] sm:$0xff]
    %v86 = vld [vmem:[#allocation8] sm:$0x1]
    %v87 = vld [vmem:[#allocation8 + $0x1] sm:$0x1]
    %v88 = vld [vmem:[#allocation8 + $0x2] sm:$0x1]
    %v89 = vld [vmem:[#allocation8 + $0x3] sm:$0x1]
    %v90 = vld [vmem:[#allocation8 + $0x4] sm:$0x1]
    %v91 = vlaneseq
    %v92 = vshrl.u32 %v91, 7
    %v93 = vsub.s32 0, %v92
    %v94 = vrot.slane %v86, %v93
    %vm95 = vcmask 523264
    %v97 = vsel %vm95, %v69, 0
    %99 = vmatprep.subr.mxu0 0.0
    %100 = vmatpush1.msra.mxu0 0.0
    %101 = vmatprep.subr.mxu0 0.0
    %102 = vmatpush1.msra.mxu0 0.0
    %103 = vmatprep.subr.mxu0 0.0
    %104 = vmatpush1.msra.mxu0 0.0
    %105 = vmatprep.subr.mxu0 0.0
    %106 = vmatpush1.msra.mxu0 0.0
    %107 = vmatprep.subr.mxu0 0.0
    %108 = vmatpush1.msra.mxu0 0.0
    %109 = vmatprep.subr.mxu0 0.0
    %110 = vmatpush1.msra.mxu0 0.0
    %111 = vmatprep.subr.mxu0 0.0
    %112 = vmatpush1.msra.mxu0 0.0
    %113 = vmatprep.subr.mxu0 0.0
    %114 = vmatpush1.msra.mxu0 0.0
    %115 = vmatprep.subr.mxu0 0.0
    %116 = vmatpush1.msra.mxu0 %v81
    %117 = vmatprep.subr.mxu0 0.0
    %118 = vmatpush1.msra.mxu0 %v80
    %119 = vmatprep.subr.mxu0 0.0
    %120 = vmatpush1.msra.mxu0 %v79
    %121 = vmatprep.subr.mxu0 0.0
    %122 = vmatpush1.msra.mxu0 %v78
    %123 = vmatprep.subr.mxu0 0.0
    %124 = vmatpush1.msra.mxu0 %v77
    %125 = vmatprep.subr.mxu0 0.0
    %126 = vmatpush1.msra.mxu0 %v76
    %127 = vmatprep.subr.mxu0 0.0
    %128 = vmatpush1.msra.mxu0 %v75
    %129 = vmatprep.subr.mxu0 0.0
    %130 = vmatpush1.msra.mxu0 %v74
    %131 = vmatprep.subr.mxu0 0.0
    %132 = vmatpush2.msra.mxu0 0.0
    %133 = vmatprep.subr.mxu0 0.0
    %134 = vmatpush2.msra.mxu0 0.0
    %135 = vmatprep.subr.mxu0 0.0
    %136 = vmatpush2.msra.mxu0 0.0
    %137 = vmatprep.subr.mxu0 0.0
    %138 = vmatpush2.msra.mxu0 0.0
    %139 = vmatprep.subr.mxu0 0.0
    %140 = vmatpush2.msra.mxu0 0.0
    %141 = vmatprep.subr.mxu0 0.0
    %142 = vmatpush2.msra.mxu0 0.0
    %143 = vmatprep.subr.mxu0 0.0
    %144 = vmatpush2.msra.mxu0 0.0
    %145 = vmatprep.subr.mxu0 0.0
    %146 = vmatpush2.msra.mxu0 0.0
    %147 = vmatprep.subr.mxu0 0.0
    %148 = vmatpush2.msra.mxu0 0.0
    %149 = vmatprep.subr.mxu0 0.0
    %150 = vmatpush2.msra.mxu0 0.0
    %151 = vmatprep.subr.mxu0 0.0
    %152 = vmatpush2.msra.mxu0 0.0
    %153 = vmatprep.subr.mxu0 0.0
    %154 = vmatpush2.msra.mxu0 0.0
    %155 = vmatprep.subr.mxu0 0.0
    %156 = vmatpush2.msra.mxu0 0.0
    %157 = vmatprep.subr.mxu0 0.0
    %158 = vmatpush2.msra.mxu0 0.0
    %159 = vmatprep.subr.mxu0 0.0
    %160 = vmatpush2.msra.mxu0 0.0
    %161 = vmatprep.subr.mxu0 0.0
    %162 = vmatpush2.msra.mxu0 0.0
    %163 = vmatprep.mubr.f32.mxu0 0.0
    %164 = vmatmul.mubr.f32.gmra.mxu0 %v97
    %v165 = vpop.f32.mrf.mxu0
    %v166 = vadd.f32 %v94, %v165
    %v167 = vpop.f32.mrf.mxu0
    %168 = vdwg.mxu0
    %vm169 = vcmask 60416
    %v170 = vsel %vm169, %v166, -inf
    %171 = vmax.xlane.f32.xlu0 %v170
    %v172 = vpop.xlane.xlu0 %171
    %v173 = vsub.f32 %v166, %v172
    %v174 = vmul.f32 %v173, 1.442695
    %v175 = vpow.pop %v174
    %v176 = vsel %vm169, %v175, 0.0
    %177 = vadd.xlane.f32.xlu0 %v176
    %v178 = vpop.xlane.xlu0 %177
    %v179 = vrcp.pop %v178
    %v180 = vmul.f32 %v175, %v179
    %v183 = vunpack.c.l.s4 1966171168
    %v184 = vunpack.c.0.s8 %v183
    %v185 = vlaneseq
    %v186 = vshrl.u32 %v185, 7
    %v187 = vsub.s32 %v184, %v186
    %v188 = vrot.slane %v180, %v187
    %v189 = vcombine.high %v188, %v188
    %v191 = vunpack.c.l.s4 1966171168
    %v192 = vunpack.c.0.s8 %v191
    %v193 = vlaneseq
    %v194 = vshrl.u32 %v193, 7
    %v195 = vsub.s32 %v192, %v194
    %v196 = vrot.slane %v188, %v195
    %v198 = vunpack.c.l.s4 1966171168
    %v199 = vunpack.c.0.s8 %v198
    %v200 = vlaneseq
    %v201 = vshrl.u32 %v200, 7
    %v202 = vsub.s32 %v199, %v201
    %v203 = vrot.slane %v189, %v202
    %v204 = vcombine.high %v196, %v196
    %v205 = vcombine.high %v203, %v203
    %vm206 = vcmask 64512
    %v207 = vsel %vm206, %v196, 0
    %209 = vmatprep.subr.mxu0 0.0
    %210 = vmatpush1.msra.mxu0 0.0
    %211 = vmatprep.subr.mxu0 0.0
    %212 = vmatpush1.msra.mxu0 0.0
    %213 = vmatprep.subr.mxu0 0.0
    %214 = vmatpush1.msra.mxu0 0.0
    %215 = vmatprep.subr.mxu0 0.0
    %216 = vmatpush1.msra.mxu0 0.0
    %217 = vmatprep.subr.mxu0 0.0
    %218 = vmatpush1.msra.mxu0 0.0
    %219 = vmatprep.subr.mxu0 0.0
    %220 = vmatpush1.msra.mxu0 0.0
    %221 = vmatprep.subr.mxu0 0.0
    %222 = vmatpush1.msra.mxu0 0.0
    %223 = vmatprep.subr.mxu0 0.0
    %224 = vmatpush1.msra.mxu0 0.0
    %225 = vmatprep.subr.mxu0 0.0
    %226 = vmatpush1.msra.mxu0 0.0
    %227 = vmatprep.subr.mxu0 0.0
    %228 = vmatpush1.msra.mxu0 0.0
    %229 = vmatprep.subr.mxu0 0.0
    %230 = vmatpush1.msra.mxu0 0.0
    %231 = vmatprep.subr.mxu0 0.0
    %232 = vmatpush1.msra.mxu0 0.0
    %233 = vmatprep.subr.mxu0 0.0
    %234 = vmatpush1.msra.mxu0 0.0
    %235 = vmatprep.subr.mxu0 0.0
    %236 = vmatpush1.msra.mxu0 0.0
    %237 = vmatprep.subr.mxu0 0.0
    %238 = vmatpush1.msra.mxu0 0.0
    %239 = vmatprep.subr.mxu0 0.0
    %240 = vmatpush1.msra.mxu0 %v70
    %241 = vmatprep.subr.mxu0 0.0
    %242 = vmatpush2.msra.mxu0 0.0
    %243 = vmatprep.subr.mxu0 0.0
    %244 = vmatpush2.msra.mxu0 0.0
    %245 = vmatprep.subr.mxu0 0.0
    %246 = vmatpush2.msra.mxu0 0.0
    %247 = vmatprep.subr.mxu0 0.0
    %248 = vmatpush2.msra.mxu0 0.0
    %249 = vmatprep.subr.mxu0 0.0
    %250 = vmatpush2.msra.mxu0 0.0
    %251 = vmatprep.subr.mxu0 0.0
    %252 = vmatpush2.msra.mxu0 0.0
    %253 = vmatprep.subr.mxu0 0.0
    %254 = vmatpush2.msra.mxu0 0.0
    %255 = vmatprep.subr.mxu0 0.0
    %256 = vmatpush2.msra.mxu0 0.0
    %257 = vmatprep.subr.mxu0 0.0
    %258 = vmatpush2.msra.mxu0 0.0
    %259 = vmatprep.subr.mxu0 0.0
    %260 = vmatpush2.msra.mxu0 0.0
    %261 = vmatprep.subr.mxu0 0.0
    %262 = vmatpush2.msra.mxu0 0.0
    %263 = vmatprep.subr.mxu0 0.0
    %264 = vmatpush2.msra.mxu0 0.0
    %265 = vmatprep.subr.mxu0 0.0
    %266 = vmatpush2.msra.mxu0 0.0
    %267 = vmatprep.subr.mxu0 0.0
    %268 = vmatpush2.msra.mxu0 0.0
    %269 = vmatprep.subr.mxu0 0.0
    %270 = vmatpush2.msra.mxu0 0.0
    %271 = vmatprep.subr.mxu0 0.0
    %272 = vmatpush2.msra.mxu0 0.0
    %273 = vmatprep.mubr.f32.mxu0 0.0
    %274 = vmatmul.mubr.f32.gmra.mxu0 %v207
    %v275 = vpop.f32.mrf.mxu0
    %v276 = vadd.f32 0.0, %v275
    %v277 = vpop.f32.mrf.mxu0
    %278 = vdwg.mxu0
    %v279 = vsel %vm206, %v203, 0
    %281 = vmatprep.subr.mxu0 0.0
    %282 = vmatpush1.msra.mxu0 0.0
    %283 = vmatprep.subr.mxu0 0.0
    %284 = vmatpush1.msra.mxu0 0.0
    %285 = vmatprep.subr.mxu0 0.0
    %286 = vmatpush1.msra.mxu0 0.0
    %287 = vmatprep.subr.mxu0 0.0
    %288 = vmatpush1.msra.mxu0 0.0
    %289 = vmatprep.subr.mxu0 0.0
    %290 = vmatpush1.msra.mxu0 0.0
    %291 = vmatprep.subr.mxu0 0.0
    %292 = vmatpush1.msra.mxu0 0.0
    %293 = vmatprep.subr.mxu0 0.0
    %294 = vmatpush1.msra.mxu0 0.0
    %295 = vmatprep.subr.mxu0 0.0
    %296 = vmatpush1.msra.mxu0 0.0
    %297 = vmatprep.subr.mxu0 0.0
    %298 = vmatpush1.msra.mxu0 0.0
    %299 = vmatprep.subr.mxu0 0.0
    %300 = vmatpush1.msra.mxu0 0.0
    %301 = vmatprep.subr.mxu0 0.0
    %302 = vmatpush1.msra.mxu0 0.0
    %303 = vmatprep.subr.mxu0 0.0
    %304 = vmatpush1.msra.mxu0 0.0
    %305 = vmatprep.subr.mxu0 0.0
    %306 = vmatpush1.msra.mxu0 0.0
    %307 = vmatprep.subr.mxu0 0.0
    %308 = vmatpush1.msra.mxu0 0.0
    %309 = vmatprep.subr.mxu0 0.0
    %310 = vmatpush1.msra.mxu0 0.0
    %311 = vmatprep.subr.mxu0 0.0
    %312 = vmatpush1.msra.mxu0 %v71
    %313 = vmatprep.subr.mxu0 0.0
    %314 = vmatpush2.msra.mxu0 0.0
    %315 = vmatprep.subr.mxu0 0.0
    %316 = vmatpush2.msra.mxu0 0.0
    %317 = vmatprep.subr.mxu0 0.0
    %318 = vmatpush2.msra.mxu0 0.0
    %319 = vmatprep.subr.mxu0 0.0
    %320 = vmatpush2.msra.mxu0 0.0
    %321 = vmatprep.subr.mxu0 0.0
    %322 = vmatpush2.msra.mxu0 0.0
    %323 = vmatprep.subr.mxu0 0.0
    %324 = vmatpush2.msra.mxu0 0.0
    %325 = vmatprep.subr.mxu0 0.0
    %326 = vmatpush2.msra.mxu0 0.0
    %327 = vmatprep.subr.mxu0 0.0
    %328 = vmatpush2.msra.mxu0 0.0
    %329 = vmatprep.subr.mxu0 0.0
    %330 = vmatpush2.msra.mxu0 0.0
    %331 = vmatprep.subr.mxu0 0.0
    %332 = vmatpush2.msra.mxu0 0.0
    %333 = vmatprep.subr.mxu0 0.0
    %334 = vmatpush2.msra.mxu0 0.0
    %335 = vmatprep.subr.mxu0 0.0
    %336 = vmatpush2.msra.mxu0 0.0
    %337 = vmatprep.subr.mxu0 0.0
    %338 = vmatpush2.msra.mxu0 0.0
    %339 = vmatprep.subr.mxu0 0.0
    %340 = vmatpush2.msra.mxu0 0.0
    %341 = vmatprep.subr.mxu0 0.0
    %342 = vmatpush2.msra.mxu0 0.0
    %343 = vmatprep.subr.mxu0 0.0
    %344 = vmatpush2.msra.mxu0 0.0
    %345 = vmatprep.mubr.f32.mxu0 0.0
    %346 = vmatmul.mubr.f32.gmra.mxu0 %v279
    %v347 = vpop.f32.mrf.mxu0
    %v348 = vadd.f32 0.0, %v347
    %v349 = vpop.f32.mrf.mxu0
    %350 = vdwg.mxu0
    %v351 = vsel %vm206, %v204, 0
    %353 = vmatprep.subr.mxu0 0.0
    %354 = vmatpush1.msra.mxu0 0.0
    %355 = vmatprep.subr.mxu0 0.0
    %356 = vmatpush1.msra.mxu0 0.0
    %357 = vmatprep.subr.mxu0 0.0
    %358 = vmatpush1.msra.mxu0 0.0
    %359 = vmatprep.subr.mxu0 0.0
    %360 = vmatpush1.msra.mxu0 0.0
    %361 = vmatprep.subr.mxu0 0.0
    %362 = vmatpush1.msra.mxu0 0.0
    %363 = vmatprep.subr.mxu0 0.0
    %364 = vmatpush1.msra.mxu0 0.0
    %365 = vmatprep.subr.mxu0 0.0
    %366 = vmatpush1.msra.mxu0 0.0
    %367 = vmatprep.subr.mxu0 0.0
    %368 = vmatpush1.msra.mxu0 0.0
    %369 = vmatprep.subr.mxu0 0.0
    %370 = vmatpush1.msra.mxu0 0.0
    %371 = vmatprep.subr.mxu0 0.0
    %372 = vmatpush1.msra.mxu0 0.0
    %373 = vmatprep.subr.mxu0 0.0
    %374 = vmatpush1.msra.mxu0 0.0
    %375 = vmatprep.subr.mxu0 0.0
    %376 = vmatpush1.msra.mxu0 0.0
    %377 = vmatprep.subr.mxu0 0.0
    %378 = vmatpush1.msra.mxu0 0.0
    %379 = vmatprep.subr.mxu0 0.0
    %380 = vmatpush1.msra.mxu0 0.0
    %381 = vmatprep.subr.mxu0 0.0
    %382 = vmatpush1.msra.mxu0 0.0
    %383 = vmatprep.subr.mxu0 0.0
    %384 = vmatpush1.msra.mxu0 %v72
    %385 = vmatprep.subr.mxu0 0.0
    %386 = vmatpush2.msra.mxu0 0.0
    %387 = vmatprep.subr.mxu0 0.0
    %388 = vmatpush2.msra.mxu0 0.0
    %389 = vmatprep.subr.mxu0 0.0
    %390 = vmatpush2.msra.mxu0 0.0
    %391 = vmatprep.subr.mxu0 0.0
    %392 = vmatpush2.msra.mxu0 0.0
    %393 = vmatprep.subr.mxu0 0.0
    %394 = vmatpush2.msra.mxu0 0.0
    %395 = vmatprep.subr.mxu0 0.0
    %396 = vmatpush2.msra.mxu0 0.0
    %397 = vmatprep.subr.mxu0 0.0
    %398 = vmatpush2.msra.mxu0 0.0
    %399 = vmatprep.subr.mxu0 0.0
    %400 = vmatpush2.msra.mxu0 0.0
    %401 = vmatprep.subr.mxu0 0.0
    %402 = vmatpush2.msra.mxu0 0.0
    %403 = vmatprep.subr.mxu0 0.0
    %404 = vmatpush2.msra.mxu0 0.0
    %405 = vmatprep.subr.mxu0 0.0
    %406 = vmatpush2.msra.mxu0 0.0
    %407 = vmatprep.subr.mxu0 0.0
    %408 = vmatpush2.msra.mxu0 0.0
    %409 = vmatprep.subr.mxu0 0.0
    %410 = vmatpush2.msra.mxu0 0.0
    %411 = vmatprep.subr.mxu0 0.0
    %412 = vmatpush2.msra.mxu0 0.0
    %413 = vmatprep.subr.mxu0 0.0
    %414 = vmatpush2.msra.mxu0 0.0
    %415 = vmatprep.subr.mxu0 0.0
    %416 = vmatpush2.msra.mxu0 0.0
    %417 = vmatprep.mubr.f32.mxu0 0.0
    %418 = vmatmul.mubr.f32.gmra.mxu0 %v351
    %v419 = vpop.f32.mrf.mxu0
    %v420 = vadd.f32 0.0, %v419
    %v421 = vpop.f32.mrf.mxu0
    %422 = vdwg.mxu0
    %v423 = vsel %vm206, %v205, 0
    %425 = vmatprep.subr.mxu0 0.0
    %426 = vmatpush1.msra.mxu0 0.0
    %427 = vmatprep.subr.mxu0 0.0
    %428 = vmatpush1.msra.mxu0 0.0
    %429 = vmatprep.subr.mxu0 0.0
    %430 = vmatpush1.msra.mxu0 0.0
    %431 = vmatprep.subr.mxu0 0.0
    %432 = vmatpush1.msra.mxu0 0.0
    %433 = vmatprep.subr.mxu0 0.0
    %434 = vmatpush1.msra.mxu0 0.0
    %435 = vmatprep.subr.mxu0 0.0
    %436 = vmatpush1.msra.mxu0 0.0
    %437 = vmatprep.subr.mxu0 0.0
    %438 = vmatpush1.msra.mxu0 0.0
    %439 = vmatprep.subr.mxu0 0.0
    %440 = vmatpush1.msra.mxu0 0.0
    %441 = vmatprep.subr.mxu0 0.0
    %442 = vmatpush1.msra.mxu0 0.0
    %443 = vmatprep.subr.mxu0 0.0
    %444 = vmatpush1.msra.mxu0 0.0
    %445 = vmatprep.subr.mxu0 0.0
    %446 = vmatpush1.msra.mxu0 0.0
    %447 = vmatprep.subr.mxu0 0.0
    %448 = vmatpush1.msra.mxu0 0.0
    %449 = vmatprep.subr.mxu0 0.0
    %450 = vmatpush1.msra.mxu0 0.0
    %451 = vmatprep.subr.mxu0 0.0
    %452 = vmatpush1.msra.mxu0 0.0
    %453 = vmatprep.subr.mxu0 0.0
    %454 = vmatpush1.msra.mxu0 0.0
    %455 = vmatprep.subr.mxu0 0.0
    %456 = vmatpush1.msra.mxu0 %v73
    %457 = vmatprep.subr.mxu0 0.0
    %458 = vmatpush2.msra.mxu0 0.0
    %459 = vmatprep.subr.mxu0 0.0
    %460 = vmatpush2.msra.mxu0 0.0
    %461 = vmatprep.subr.mxu0 0.0
    %462 = vmatpush2.msra.mxu0 0.0
    %463 = vmatprep.subr.mxu0 0.0
    %464 = vmatpush2.msra.mxu0 0.0
    %465 = vmatprep.subr.mxu0 0.0
    %466 = vmatpush2.msra.mxu0 0.0
    %467 = vmatprep.subr.mxu0 0.0
    %468 = vmatpush2.msra.mxu0 0.0
    %469 = vmatprep.subr.mxu0 0.0
    %470 = vmatpush2.msra.mxu0 0.0
    %471 = vmatprep.subr.mxu0 0.0
    %472 = vmatpush2.msra.mxu0 0.0
    %473 = vmatprep.subr.mxu0 0.0
    %474 = vmatpush2.msra.mxu0 0.0
    %475 = vmatprep.subr.mxu0 0.0
    %476 = vmatpush2.msra.mxu0 0.0
    %477 = vmatprep.subr.mxu0 0.0
    %478 = vmatpush2.msra.mxu0 0.0
    %479 = vmatprep.subr.mxu0 0.0
    %480 = vmatpush2.msra.mxu0 0.0
    %481 = vmatprep.subr.mxu0 0.0
    %482 = vmatpush2.msra.mxu0 0.0
    %483 = vmatprep.subr.mxu0 0.0
    %484 = vmatpush2.msra.mxu0 0.0
    %485 = vmatprep.subr.mxu0 0.0
    %486 = vmatpush2.msra.mxu0 0.0
    %487 = vmatprep.subr.mxu0 0.0
    %488 = vmatpush2.msra.mxu0 0.0
    %489 = vmatprep.mubr.f32.mxu0 0.0
    %490 = vmatmul.mubr.f32.gmra.mxu0 %v423
    %v491 = vpop.f32.mrf.mxu0
    %v492 = vadd.f32 0.0, %v491
    %v493 = vpop.f32.mrf.mxu0
    %494 = vdwg.mxu0
    %v495 = vlaneseq
    %v496 = vshrl.u32 %v495, 7
    %v497 = vsub.s32 0, %v496
    %v498 = vrot.slane %v87, %v497
    %v503 = vrot.slane %v348, 7
    %vm504 = vcmask 1041409
    %v505 = vsel %vm504, %v503, %v276
    %v506 = vrot.slane %v420, 6
    %vm507 = vcmask 1042434
    %v508 = vsel %vm507, %v506, %v505
    %v509 = vrot.slane %v492, 5
    %vm510 = vcmask 1043459
    %v511 = vsel %vm510, %v509, %v508
    %520 = vrot.lane.b32.xlu0 %v74, 120
    %v521 = vpop.permute.xlu0 %520
    %522 = vrot.lane.b32.xlu0 %v75, 120
    %v523 = vpop.permute.xlu0 %522
    %524 = vrot.lane.b32.xlu0 %v76, 120
    %v525 = vpop.permute.xlu0 %524
    %526 = vrot.lane.b32.xlu0 %v77, 120
    %v527 = vpop.permute.xlu0 %526
    %528 = vrot.lane.b32.xlu0 %v78, 120
    %v529 = vpop.permute.xlu0 %528
    %530 = vrot.lane.b32.xlu0 %v79, 120
    %v531 = vpop.permute.xlu0 %530
    %532 = vrot.lane.b32.xlu0 %v80, 120
    %v533 = vpop.permute.xlu0 %532
    %534 = vrot.lane.b32.xlu0 %v81, 120
    %v535 = vpop.permute.xlu0 %534
    %v544 = vsel %vm95, %v511, 0
    %546 = vmatprep.subr.mxu0 0.0
    %547 = vmatpush1.msra.mxu0 0.0
    %548 = vmatprep.subr.mxu0 0.0
    %549 = vmatpush1.msra.mxu0 0.0
    %550 = vmatprep.subr.mxu0 0.0
    %551 = vmatpush1.msra.mxu0 0.0
    %552 = vmatprep.subr.mxu0 0.0
    %553 = vmatpush1.msra.mxu0 0.0
    %554 = vmatprep.subr.mxu0 0.0
    %555 = vmatpush1.msra.mxu0 0.0
    %556 = vmatprep.subr.mxu0 0.0
    %557 = vmatpush1.msra.mxu0 0.0
    %558 = vmatprep.subr.mxu0 0.0
    %559 = vmatpush1.msra.mxu0 0.0
    %560 = vmatprep.subr.mxu0 0.0
    %561 = vmatpush1.msra.mxu0 0.0
    %562 = vmatprep.subr.mxu0 0.0
    %563 = vmatpush1.msra.mxu0 %v535
    %564 = vmatprep.subr.mxu0 0.0
    %565 = vmatpush1.msra.mxu0 %v533
    %566 = vmatprep.subr.mxu0 0.0
    %567 = vmatpush1.msra.mxu0 %v531
    %568 = vmatprep.subr.mxu0 0.0
    %569 = vmatpush1.msra.mxu0 %v529
    %570 = vmatprep.subr.mxu0 0.0
    %571 = vmatpush1.msra.mxu0 %v527
    %572 = vmatprep.subr.mxu0 0.0
    %573 = vmatpush1.msra.mxu0 %v525
    %574 = vmatprep.subr.mxu0 0.0
    %575 = vmatpush1.msra.mxu0 %v523
    %576 = vmatprep.subr.mxu0 0.0
    %577 = vmatpush1.msra.mxu0 %v521
    %578 = vmatprep.subr.mxu0 0.0
    %579 = vmatpush2.msra.mxu0 0.0
    %580 = vmatprep.subr.mxu0 0.0
    %581 = vmatpush2.msra.mxu0 0.0
    %582 = vmatprep.subr.mxu0 0.0
    %583 = vmatpush2.msra.mxu0 0.0
    %584 = vmatprep.subr.mxu0 0.0
    %585 = vmatpush2.msra.mxu0 0.0
    %586 = vmatprep.subr.mxu0 0.0
    %587 = vmatpush2.msra.mxu0 0.0
    %588 = vmatprep.subr.mxu0 0.0
    %589 = vmatpush2.msra.mxu0 0.0
    %590 = vmatprep.subr.mxu0 0.0
    %591 = vmatpush2.msra.mxu0 0.0
    %592 = vmatprep.subr.mxu0 0.0
    %593 = vmatpush2.msra.mxu0 0.0
    %594 = vmatprep.subr.mxu0 0.0
    %595 = vmatpush2.msra.mxu0 0.0
    %596 = vmatprep.subr.mxu0 0.0
    %597 = vmatpush2.msra.mxu0 0.0
    %598 = vmatprep.subr.mxu0 0.0
    %599 = vmatpush2.msra.mxu0 0.0
    %600 = vmatprep.subr.mxu0 0.0
    %601 = vmatpush2.msra.mxu0 0.0
    %602 = vmatprep.subr.mxu0 0.0
    %603 = vmatpush2.msra.mxu0 0.0
    %604 = vmatprep.subr.mxu0 0.0
    %605 = vmatpush2.msra.mxu0 0.0
    %606 = vmatprep.subr.mxu0 0.0
    %607 = vmatpush2.msra.mxu0 0.0
    %608 = vmatprep.subr.mxu0 0.0
    %609 = vmatpush2.msra.mxu0 0.0
    %610 = vmatprep.mubr.f32.mxu0 0.0
    %611 = vmatmul.mubr.f32.gmra.mxu0 %v544
    %v612 = vpop.f32.mrf.mxu0
    %v613 = vadd.f32 %v498, %v612
    %v614 = vpop.f32.mrf.mxu0
    %615 = vdwg.mxu0
    %v616 = vmax.f32 %v613, 0.0
    %vm617 = vcmask 257024
    %v618 = vsel %vm617, %v616, 0.0
    %v619 = vrot.slane %v618, 4
    %v620 = vadd.f32 %v618, %v619
    %v621 = vrot.slane %v620, 2
    %v622 = vadd.f32 %v620, %v621
    %v623 = vrot.slane %v622, 1
    %v624 = vadd.f32 %v622, %v623
    %v625 = vrcp.pop 4.0
    %v626 = vmul.f32 %v624, %v625
    %v627 = vsub.f32 %v616, %v626
    %v628 = vmul.f32 %v627, %v627
    %v629 = vsel %vm617, %v628, 0.0
    %v630 = vrot.slane %v629, 4
    %v631 = vadd.f32 %v629, %v630
    %v632 = vrot.slane %v631, 2
    %v633 = vadd.f32 %v631, %v632
    %v634 = vrot.slane %v633, 1
    %v635 = vadd.f32 %v633, %v634
    %v636 = vmul.f32 %v635, %v625
    %v637 = vadd.f32 %v636, 1e-05
    %v638 = vrsqrt.pop %v637
    %v639 = vmul.f32 %v627, %v638
    %v640 = vlaneseq
    %v641 = vshrl.u32 %v640, 7
    %v642 = vsub.s32 0, %v641
    %v643 = vrot.slane %v88, %v642
    %v644 = vmul.f32 %v639, %v643
    %v645 = vlaneseq
    %v646 = vshrl.u32 %v645, 7
    %v647 = vsub.s32 0, %v646
    %v648 = vrot.slane %v89, %v647
    %v649 = vadd.f32 %v644, %v648
    %v650 = vlaneseq
    %v651 = vshrl.u32 %v650, 7
    %v652 = vsub.s32 0, %v651
    %v653 = vrot.slane %v90, %v652
    %658 = vrot.lane.b32.xlu0 %v82, 88
    %v659 = vpop.permute.xlu0 %658
    %660 = vrot.lane.b32.xlu0 %v83, 88
    %v661 = vpop.permute.xlu0 %660
    %662 = vrot.lane.b32.xlu0 %v84, 88
    %v663 = vpop.permute.xlu0 %662
    %664 = vrot.lane.b32.xlu0 %v85, 88
    %v665 = vpop.permute.xlu0 %664
    %vm670 = vcmask 261120
    %v672 = vsel %vm670, %v649, 0
    %674 = vmatprep.subr.mxu0 0.0
    %675 = vmatpush1.msra.mxu0 0.0
    %676 = vmatprep.subr.mxu0 0.0
    %677 = vmatpush1.msra.mxu0 0.0
    %678 = vmatprep.subr.mxu0 0.0
    %679 = vmatpush1.msra.mxu0 0.0
    %680 = vmatprep.subr.mxu0 0.0
    %681 = vmatpush1.msra.mxu0 0.0
    %682 = vmatprep.subr.mxu0 0.0
    %683 = vmatpush1.msra.mxu0 0.0
    %684 = vmatprep.subr.mxu0 0.0
    %685 = vmatpush1.msra.mxu0 0.0
    %686 = vmatprep.subr.mxu0 0.0
    %687 = vmatpush1.msra.mxu0 0.0
    %688 = vmatprep.subr.mxu0 0.0
    %689 = vmatpush1.msra.mxu0 0.0
    %690 = vmatprep.subr.mxu0 0.0
    %691 = vmatpush1.msra.mxu0 0.0
    %692 = vmatprep.subr.mxu0 0.0
    %693 = vmatpush1.msra.mxu0 0.0
    %694 = vmatprep.subr.mxu0 0.0
    %695 = vmatpush1.msra.mxu0 0.0
    %696 = vmatprep.subr.mxu0 0.0
    %697 = vmatpush1.msra.mxu0 0.0
    %698 = vmatprep.subr.mxu0 0.0
    %699 = vmatpush1.msra.mxu0 %v665
    %700 = vmatprep.subr.mxu0 0.0
    %701 = vmatpush1.msra.mxu0 %v663
    %702 = vmatprep.subr.mxu0 0.0
    %703 = vmatpush1.msra.mxu0 %v661
    %704 = vmatprep.subr.mxu0 0.0
    %705 = vmatpush1.msra.mxu0 %v659
    %706 = vmatprep.subr.mxu0 0.0
    %707 = vmatpush2.msra.mxu0 0.0
    %708 = vmatprep.subr.mxu0 0.0
    %709 = vmatpush2.msra.mxu0 0.0
    %710 = vmatprep.subr.mxu0 0.0
    %711 = vmatpush2.msra.mxu0 0.0
    %712 = vmatprep.subr.mxu0 0.0
    %713 = vmatpush2.msra.mxu0 0.0
    %714 = vmatprep.subr.mxu0 0.0
    %715 = vmatpush2.msra.mxu0 0.0
    %716 = vmatprep.subr.mxu0 0.0
    %717 = vmatpush2.msra.mxu0 0.0
    %718 = vmatprep.subr.mxu0 0.0
    %719 = vmatpush2.msra.mxu0 0.0
    %720 = vmatprep.subr.mxu0 0.0
    %721 = vmatpush2.msra.mxu0 0.0
    %722 = vmatprep.subr.mxu0 0.0
    %723 = vmatpush2.msra.mxu0 0.0
    %724 = vmatprep.subr.mxu0 0.0
    %725 = vmatpush2.msra.mxu0 0.0
    %726 = vmatprep.subr.mxu0 0.0
    %727 = vmatpush2.msra.mxu0 0.0
    %728 = vmatprep.subr.mxu0 0.0
    %729 = vmatpush2.msra.mxu0 0.0
    %730 = vmatprep.subr.mxu0 0.0
    %731 = vmatpush2.msra.mxu0 0.0
    %732 = vmatprep.subr.mxu0 0.0
    %733 = vmatpush2.msra.mxu0 0.0
    %734 = vmatprep.subr.mxu0 0.0
    %735 = vmatpush2.msra.mxu0 0.0
    %736 = vmatprep.subr.mxu0 0.0
    %737 = vmatpush2.msra.mxu0 0.0
    %738 = vmatprep.mubr.f32.mxu0 0.0
    %739 = vmatmul.mubr.f32.gmra.mxu0 %v672
    %v740 = vpop.f32.mrf.mxu0
    %v741 = vadd.f32 %v653, %v740
    %v742 = vpop.f32.mrf.mxu0
    %743 = vdwg.mxu0
    %v744 = vmax.f32 %v741, 0.0
    %v745 = vsel %vm169, %v744, -inf
    %746 = vmax.xlane.f32.xlu0 %v745
    %v747 = vpop.xlane.xlu0 %746
    %v748 = vsub.f32 %v744, %v747
    %v749 = vmul.f32 %v748, 1.442695
    %v750 = vpow.pop %v749
    %v751 = vsel %vm169, %v750, 0.0
    %752 = vadd.xlane.f32.xlu0 %v751
    %v753 = vpop.xlane.xlu0 %752
    %v754 = vrcp.pop %v753
    %v755 = vmul.f32 %v750, %v754
    %757 = vrot.lane.b32.xlu0 %v755, 8
    %v758 = vpop.permute.xlu0 %757
    %v760 = vsel %vm206, %v180, %v758
    %vm761 = vcmask 130048
    %v762 = vsel %vm761, %v760, 0.0
    %vm763 = vcmask 1043456
    %v764 = vsel %vm763, %v762, 0.0
    %765 = vst [vmem:[#allocation10] sm:$0xff] %v764
    // Predicated region
    $region34: #{tpu_custom_call.1} parent=1 // pred_check
      _
    $region35: #{tpu_custom_call.1} parent=1 // pred_check_branch
      %767 = sbr.rel (0) target = $region37
    $region36: #{tpu_custom_call.1} parent=1 // pred_region
      %s769 = ssub.s32 128, 128
      %770 = vsyncadd [#allocation4], %s769
      %s772 = sshll.u32 [#allocation10], 4
      %s773 = int_to_ptr.vmem [resolvable:$true] %s772
      %775 = dma.vmem_to_hbm [thread:$0]  %s773, 128, %s4, [#allocation4]
    $region37: #{tpu_custom_call.1} parent=1 // pred_fallthru
      _
    // Predicated region
    $region38: #{tpu_custom_call.1} parent=1 // pred_check
      _
    $region39: #{tpu_custom_call.1} parent=1 // pred_check_branch
      %777 = sbr.rel (0) target = $region41
    $region40: #{tpu_custom_call.1} parent=1 // pred_region
      %778 = dma.done [#allocation4], 128
    $region41: #{tpu_custom_call.1} parent=1 // pred_fallthru
      _
    %779 = vsyncpa [#allocation3], 1
    %780 = vsyncpa [#allocation6], 1
    %781 = vsyncpa [#allocation9], 1
    %782 = vsyncpa [#allocation4], 1

</llo_original>
